<compile_context>
chip_gen: v5e
topology: v5e:2x2
jax: 0.10.0
libtpu: 0.0.40
codegen_flags: <defaults>
</compile_context>

<pallas_src>
import functools

import jax
import jax.numpy as jnp
from jax.experimental import pallas as pl
from jax.experimental.pallas import tpu as pltpu


def _round_up(x, m):
    return (x + m - 1) // m * m


def sideout_kernel(x_ref, w1_ref, b1_ref, w2_ref, b2_ref, out_ref, *, Wp, Lout):
    """Fused SideoutBlock forward for one tall-stacked batch chunk.

    x_ref   : (Cin, Lin)   bf16  tall-stacked, zero-padded, flattened chunk
    w1_ref  : (Cmid, 9*Cin) bf16  3x3 conv weights with BN scale folded in
    b1_ref  : (Cmid, 1)    f32   folded conv1 bias + BN bias
    w2_ref  : (Cout*Cmid,) f32   SMEM: 1x1 conv weights (row-major)
    b2_ref  : (Cout,)      f32   SMEM: 1x1 conv bias
    out_ref : (Cout, Lout) f32   conv output (separator rows / pad columns are
                                 stripped by the wrapper)
    """
    x = x_ref[...]                                             # (Cin, Lin)

    # im2col-lite: every 3x3 tap of the WHOLE chunk is one contiguous slice of
    # the tall flat layout -> one K = 9*Cin MXU matmul for the whole chunk.
    taps = [x[:, dy * Wp + dx: dy * Wp + dx + Lout]
            for dy in range(3) for dx in range(3)]
    k = jnp.concatenate(taps, axis=0)                          # (9*Cin, Lout)

    # conv1 (3x3, padding=1) + folded BN + ReLU: single bf16 MXU matmul with
    # f32 accumulation, bias/ReLU in f32.
    h = jnp.dot(w1_ref[...], k, preferred_element_type=jnp.float32)
    h = jnp.maximum(h + b1_ref[...], 0.0)                      # (Cmid, Lout)

    # Dropout2d(0.1): identity in eval mode.

    # conv2 (1x1): M = Cout is tiny -> VPU scalar-broadcast FMAs from SMEM
    # weights instead of a second (underfilled) MXU matmul + drain.
    n_out = out_ref.shape[0]
    n_mid = h.shape[0]
    for o in range(n_out):
        y = h[0:1, :] * w2_ref[o * n_mid]
        for c in range(1, n_mid):
            y = y + h[c:c + 1, :] * w2_ref[o * n_mid + c]
        out_ref[o:o + 1, :] = (y + b2_ref[o]).astype(out_ref.dtype)


def _pick_chunk_size(N, Cin, H, W):
    """Batch elements per grid step: keep each step's input block a few hundred
    KB and use >=2 grid steps when N > 1 (pipelining + both v7x TensorCores)."""
    per_elem_bytes = Cin * (H + 1) * (W + 2) * 2          # bf16 stacked element
    nb = max(1, (512 * 1024) // max(per_elem_bytes, 1))
    if N > 1:
        nb = min(nb, max(1, N // 2))                      # >= 2 grid steps
    nb = min(nb, N)
    while N % nb:                                         # uniform chunks
        nb -= 1
    return nb


def sideout_forward(x_nchw, w1_fold, b1_fold, w2_mat, b2_vec):
    """x_nchw: (N, Cin, H, W) f32 -> (N, Cout, H, W) f32 (eval-mode)."""
    N, Cin, H, W = x_nchw.shape
    Cmid = w1_fold.shape[0]
    Cout = w2_mat.shape[0]
    Wp = W + 2

    nb = _pick_chunk_size(N, Cin, H, W)
    G = N // nb
    Lneed = nb * (H + 1) * Wp                 # flat length of data + separator rows
    Lout = _round_up(Lneed, 128)              # lane-dense, 128-aligned output
    Lin = _round_up(Lout + 2 * Wp + 2, 128)   # covers the furthest (dy=2,dx=2) tap

    # bf16 activations: MXU-native operands and half the HBM DMA bytes.
    xb = x_nchw.astype(jnp.bfloat16)

    # Tall-stack each chunk's nb elements along H.  Adjacent elements share a
    # single zero separator row (bottom pad of e == top pad of e+1), so the
    # whole chunk becomes one flat conv problem.
    xr = xb.reshape(G, nb, Cin, H, W).transpose(0, 2, 1, 3, 4)     # (G,Cin,nb,H,W)
    xp = jnp.pad(xr, ((0, 0), (0, 0), (0, 0), (0, 1), (1, 1)))     # (G,Cin,nb,H+1,Wp)
    flat = xp.reshape(G, Cin, Lneed)
    xin = jnp.pad(flat, ((0, 0), (0, 0), (Wp, Lin - Wp - Lneed)))  # (G,Cin,Lin)

    w1_bf = w1_fold.astype(jnp.bfloat16)                 # (Cmid, 9*Cin)
    b1_f32 = b1_fold.astype(jnp.float32)                 # (Cmid, 1)
    w2_flat = w2_mat.reshape(-1).astype(jnp.float32)     # (Cout*Cmid,)  -> SMEM
    b2_flat = b2_vec.reshape(-1).astype(jnp.float32)     # (Cout,)       -> SMEM

    out = pl.pallas_call(
        functools.partial(sideout_kernel, Wp=Wp, Lout=Lout),
        out_shape=jax.ShapeDtypeStruct((G, Cout, Lout), jnp.float32),
        grid_spec=pltpu.PrefetchScalarGridSpec(
            num_scalar_prefetch=0,
            grid=(G,),
            in_specs=[
                pl.BlockSpec((None, Cin, Lin), lambda g: (g, 0, 0)),
                pl.BlockSpec((Cmid, 9 * Cin), lambda g: (0, 0)),
                pl.BlockSpec((Cmid, 1), lambda g: (0, 0)),
                pl.BlockSpec(memory_space=pltpu.MemorySpace.SMEM),
                pl.BlockSpec(memory_space=pltpu.MemorySpace.SMEM),
            ],
            out_specs=pl.BlockSpec((None, Cout, Lout), lambda g: (g, 0, 0)),
        ),
        compiler_params=pltpu.CompilerParams(
            dimension_semantics=("parallel",),
            vmem_limit_bytes=32 * 1024 * 1024),
    )(xin, w1_bf, b1_f32, w2_flat, b2_flat)

    # Strip the 128-padding, the per-element separator row, and the two
    # horizontal pad columns; un-stack chunks back into the batch.
    out = out[:, :, :Lneed].reshape(G, Cout, nb, H + 1, Wp)[:, :, :, :H, :W]
    return out.transpose(0, 2, 1, 3, 4).reshape(N, Cout, H, W)


def fold_params(w1_oihw, b1_conv, gamma, beta, running_mean, running_var, eps,
                w2_oihw, b2_conv):
    """Fold eval-mode BN into conv1 weights/bias; flatten conv weights."""
    O, I, kh, kw = w1_oihw.shape
    scale = gamma / jnp.sqrt(running_var + eps)                     # (Cmid,)
    # (O, I, kh, kw) -> (O, kh, kw, I) -> (O, 9*I); matches the kernel's tap
    # order [(dy, dx) row-major, then input channel].
    w1_mat = jnp.transpose(w1_oihw, (0, 2, 3, 1)).reshape(O, kh * kw * I)
    w1_fold = w1_mat * scale[:, None]
    b1_fold = (scale * (b1_conv - running_mean) + beta)[:, None]    # (Cmid, 1)
    w2_mat = w2_oihw[:, :, 0, 0]                                    # (Cout, Cmid)
    b2_vec = b2_conv                                                # (Cout,)
    return w1_fold, b1_fold, w2_mat, b2_vec


def reference_forward(x_nchw, w1_oihw, b1_conv, gamma, beta, running_mean,
                      running_var, eps, w2_oihw, b2_conv):
    """Pure-JAX reference with UNfolded BN (validates folding + kernel)."""
    y = jax.lax.conv_general_dilated(
        x_nchw, w1_oihw, window_strides=(1, 1), padding=((1, 1), (1, 1)),
        dimension_numbers=("NCHW", "OIHW", "NCHW"),
        precision=jax.lax.Precision.HIGHEST)
    y = y + b1_conv[None, :, None, None]
    y = (y - running_mean[None, :, None, None]) / jnp.sqrt(
        running_var[None, :, None, None] + eps)
    y = y * gamma[None, :, None, None] + beta[None, :, None, None]
    y = jnp.maximum(y, 0.0)
    # Dropout2d eval mode = identity.
    w2 = w2_oihw[:, :, 0, 0]
    y = jnp.einsum("oc,nchw->nohw", w2, y,
                   precision=jax.lax.Precision.HIGHEST)
    return y + b2_conv[None, :, None, None]


if __name__ == "__main__":
    # Small shapes consistent with the module: in_channels=8 -> mid=2, out=1.
    N, Cin, H, W = 2, 8, 16, 16
    Cmid, Cout = Cin // 4, 1
    eps = 1e-5

    key = jax.random.PRNGKey(0)
    keys = jax.random.split(key, 9)

    x = jax.random.normal(keys[0], (N, Cin, H, W), jnp.float32)

    # conv1 weights/bias (PyTorch layout O, I, kh, kw).
    w1_oihw = 0.1 * jax.random.normal(keys[1], (Cmid, Cin, 3, 3), jnp.float32)
    b1_conv = 0.1 * jax.random.normal(keys[2], (Cmid,), jnp.float32)

    # BatchNorm2d eval-mode params with nontrivial running stats.
    gamma = 1.0 + 0.1 * jax.random.normal(keys[3], (Cmid,), jnp.float32)
    beta = 0.1 * jax.random.normal(keys[4], (Cmid,), jnp.float32)
    running_mean = 0.1 * jax.random.normal(keys[5], (Cmid,), jnp.float32)
    running_var = 1.0 + 0.2 * jax.random.uniform(keys[6], (Cmid,), jnp.float32)

    # conv2: 1x1 conv.
    w2_oihw = 0.1 * jax.random.normal(keys[7], (Cout, Cmid, 1, 1), jnp.float32)
    b2_conv = 0.1 * jax.random.normal(keys[8], (Cout,), jnp.float32)

    w1_f, b1_f, w2_m, b2_v = fold_params(
        w1_oihw, b1_conv, gamma, beta, running_mean, running_var, eps,
        w2_oihw, b2_conv)

    out = jax.block_until_ready(sideout_forward(x, w1_f, b1_f, w2_m, b2_v))
    ref = jax.block_until_ready(reference_forward(
        x, w1_oihw, b1_conv, gamma, beta, running_mean, running_var, eps,
        w2_oihw, b2_conv))

    assert out.shape == (N, Cout, H, W), out.shape
    # bf16 MXU operands with f32 accumulation (K=72): tolerance sized for bf16.
    max_err = float(jnp.max(jnp.abs(out - ref)))
    assert jnp.allclose(out, ref, atol=5e-3, rtol=5e-3), max_err

    print("KERNEL_OK")
</pallas_src>

<mosaic_0001>
module attributes {stable_mosaic.version = 11 : i64} {
  func.func @sideout_kernel(%arg0: i32, %arg1: memref<1x8x512xbf16, #tpu.memory_space<vmem>>, %arg2: memref<2x72xbf16, #tpu.memory_space<vmem>>, %arg3: memref<2x1xf32, #tpu.memory_space<vmem>>, %arg4: memref<2xf32, #tpu.memory_space<smem>>, %arg5: memref<1xf32, #tpu.memory_space<smem>>, %arg6: memref<1x1x384xf32, #tpu.memory_space<vmem>>) attributes {dimension_semantics = [#tpu.dimension_semantics<parallel>], iteration_bounds = array<i64: 2>, scalar_prefetch = 0 : i64, scratch_operands = 0 : i64, tpu.core_type = #tpu.core_type<tc>, window_params = [{transform_indices = @transform_0, window_bounds = array<i64: 1, 8, 512>}, {pipeline_mode = #tpu.pipeline_mode<synchronous>, transform_indices = @transform_1, window_bounds = array<i64: 2, 72>}, {pipeline_mode = #tpu.pipeline_mode<synchronous>, transform_indices = @transform_2, window_bounds = array<i64: 2, 1>}, {transform_indices = @transform_3, window_bounds = array<i64: 2>}, {transform_indices = @transform_4, window_bounds = array<i64: 1>}, {transform_indices = @transform_5, window_bounds = array<i64: 1, 1, 384>}]} {
    %c0 = arith.constant 0 : index
    %c0_0 = arith.constant 0 : index
    %c0_1 = arith.constant 0 : index
    %0 = vector.load %arg1[%c0, %c0_0, %c0_1] : memref<1x8x512xbf16, #tpu.memory_space<vmem>>, vector<1x8x512xbf16>
    %1 = vector.shape_cast %0 : vector<1x8x512xbf16> to vector<8x512xbf16>
    %2 = vector.extract_strided_slice %1 {offsets = [0, 0], sizes = [8, 384], strides = [1, 1]} : vector<8x512xbf16> to vector<8x384xbf16>
    %3 = vector.extract_strided_slice %1 {offsets = [0, 1], sizes = [8, 384], strides = [1, 1]} : vector<8x512xbf16> to vector<8x384xbf16>
    %4 = vector.extract_strided_slice %1 {offsets = [0, 2], sizes = [8, 384], strides = [1, 1]} : vector<8x512xbf16> to vector<8x384xbf16>
    %5 = vector.extract_strided_slice %1 {offsets = [0, 18], sizes = [8, 384], strides = [1, 1]} : vector<8x512xbf16> to vector<8x384xbf16>
    %6 = vector.extract_strided_slice %1 {offsets = [0, 19], sizes = [8, 384], strides = [1, 1]} : vector<8x512xbf16> to vector<8x384xbf16>
    %7 = vector.extract_strided_slice %1 {offsets = [0, 20], sizes = [8, 384], strides = [1, 1]} : vector<8x512xbf16> to vector<8x384xbf16>
    %8 = vector.extract_strided_slice %1 {offsets = [0, 36], sizes = [8, 384], strides = [1, 1]} : vector<8x512xbf16> to vector<8x384xbf16>
    %9 = vector.extract_strided_slice %1 {offsets = [0, 37], sizes = [8, 384], strides = [1, 1]} : vector<8x512xbf16> to vector<8x384xbf16>
    %10 = vector.extract_strided_slice %1 {offsets = [0, 38], sizes = [8, 384], strides = [1, 1]} : vector<8x512xbf16> to vector<8x384xbf16>
    %11 = tpu.concatenate %2, %3, %4, %5, %6, %7, %8, %9, %10 in 0 : vector<8x384xbf16>, vector<8x384xbf16>, vector<8x384xbf16>, vector<8x384xbf16>, vector<8x384xbf16>, vector<8x384xbf16>, vector<8x384xbf16>, vector<8x384xbf16>, vector<8x384xbf16> -> vector<72x384xbf16>
    %c0_2 = arith.constant 0 : index
    %c0_3 = arith.constant 0 : index
    %12 = vector.load %arg2[%c0_2, %c0_3] : memref<2x72xbf16, #tpu.memory_space<vmem>>, vector<2x72xbf16>
    %cst = arith.constant dense<0.000000e+00> : vector<2x384xf32>
    %13 = tpu.matmul %12, %11, %cst {dimension_numbers = #tpu.dot_dimension_numbers<[1], [0], [0], [1], [0, 0, 1, 1], [], []>} : vector<2x72xbf16>, vector<72x384xbf16>, vector<2x384xf32> -> vector<2x384xf32>
    %c0_4 = arith.constant 0 : index
    %c0_5 = arith.constant 0 : index
    %14 = vector.load %arg3[%c0_4, %c0_5] : memref<2x1xf32, #tpu.memory_space<vmem>>, vector<2x1xf32>
    %15 = vector.broadcast %14 : vector<2x1xf32> to vector<2x384xf32>
    %16 = arith.addf %13, %15 : vector<2x384xf32>
    %cst_6 = arith.constant 0.000000e+00 : f32
    %17 = vector.broadcast %cst_6 : f32 to vector<2x384xf32>
    %18 = arith.maximumf %16, %17 : vector<2x384xf32>
    %19 = vector.extract_strided_slice %18 {offsets = [0, 0], sizes = [1, 384], strides = [1, 1]} : vector<2x384xf32> to vector<1x384xf32>
    %c0_7 = arith.constant 0 : index
    %20 = memref.load %arg4[%c0_7] : memref<2xf32, #tpu.memory_space<smem>>
    %21 = vector.broadcast %20 : f32 to vector<1x384xf32>
    %22 = arith.mulf %19, %21 : vector<1x384xf32>
    %23 = vector.extract_strided_slice %18 {offsets = [1, 0], sizes = [1, 384], strides = [1, 1]} : vector<2x384xf32> to vector<1x384xf32>
    %c1 = arith.constant 1 : index
    %24 = memref.load %arg4[%c1] : memref<2xf32, #tpu.memory_space<smem>>
    %25 = vector.broadcast %24 : f32 to vector<1x384xf32>
    %26 = arith.mulf %23, %25 : vector<1x384xf32>
    %27 = arith.addf %22, %26 : vector<1x384xf32>
    %c0_8 = arith.constant 0 : index
    %28 = memref.load %arg5[%c0_8] : memref<1xf32, #tpu.memory_space<smem>>
    %29 = vector.broadcast %28 : f32 to vector<1x384xf32>
    %30 = arith.addf %27, %29 : vector<1x384xf32>
    %c0_9 = arith.constant 0 : index
    %c0_10 = arith.constant 0 : index
    %c0_11 = arith.constant 0 : index
    %31 = vector.load %arg6[%c0_9, %c0_10, %c0_11] : memref<1x1x384xf32, #tpu.memory_space<vmem>>, vector<1x1x384xf32>
    %32 = vector.shape_cast %31 : vector<1x1x384xf32> to vector<1x384xf32>
    %33 = vector.shape_cast %30 : vector<1x384xf32> to vector<1x1x384xf32>
    tpu.vector_store %arg6[%c0_9, %c0_10, %c0_11], %33 {strides = array<i32>} : memref<1x1x384xf32, #tpu.memory_space<vmem>>, vector<1x1x384xf32>,
    return
  }
  func.func @transform_0(%arg0: i32) -> (i32, i32, i32) {
    %c0_i32 = arith.constant 0 : i32
    %c0_i32_0 = arith.constant 0 : i32
    %c0_i32_1 = arith.constant 0 : i32
    return %arg0, %c0_i32, %c0_i32_0 : i32, i32, i32
  }
  func.func @transform_1(%arg0: i32) -> (i32, i32) {
    %c0_i32 = arith.constant 0 : i32
    %c0_i32_0 = arith.constant 0 : i32
    %c0_i32_1 = arith.constant 0 : i32
    return %c0_i32, %c0_i32_0 : i32, i32
  }
  func.func @transform_2(%arg0: i32) -> (i32, i32) {
    %c0_i32 = arith.constant 0 : i32
    %c0_i32_0 = arith.constant 0 : i32
    %c0_i32_1 = arith.constant 0 : i32
    return %c0_i32, %c0_i32_0 : i32, i32
  }
  func.func @transform_3(%arg0: i32) -> i32 {
    %c0_i32 = arith.constant 0 : i32
    %c0_i32_0 = arith.constant 0 : i32
    return %c0_i32 : i32
  }
  func.func @transform_4(%arg0: i32) -> i32 {
    %c0_i32 = arith.constant 0 : i32
    %c0_i32_0 = arith.constant 0 : i32
    return %c0_i32 : i32
  }
  func.func @transform_5(%arg0: i32) -> (i32, i32, i32) {
    %c0_i32 = arith.constant 0 : i32
    %c0_i32_0 = arith.constant 0 : i32
    %c0_i32_1 = arith.constant 0 : i32
    return %arg0, %c0_i32, %c0_i32_0 : i32, i32, i32
  }
}

</mosaic_0001>

<llo_original>
// kernel: tpu_custom_call.1
$region0: #{tpu_custom_call.1}
  #allocation0 [shape = 'u32[]', space=smem, size = 0x4, offset = 0x4, fixed_abs, tag = 'smem constant byte address 0x4 - core index']
  #allocation1 [shape = 'u32[72,128]{1,0:T(1,128)}', space=vmem, size = 0x9000, scoped, tag = 'internal scratch']
  #allocation2 [shape = 'f32[1]{0:T(128)S(6)}', space=smem, size = 0x200, scoped, tag = 'scoped memory for tpu_custom_call.1']
  %s0 = inlined_call_operand.hbm [shape: bf16[2,8,512], index: 0, kind: input, shape index: {}]
  %s1 = inlined_call_operand.vmem [shape: bf16[2,72], index: 1, kind: input, shape index: {}]
  %s2 = inlined_call_operand.vmem [shape: f32[2,1], index: 2, kind: input, shape index: {}]
  %s3 = inlined_call_operand.vmem [shape: f32[2], index: 3, kind: input, shape index: {}]
  %s4 = inlined_call_operand.<no memory space> [shape: f32[1], index: 4, kind: input, shape index: {}]
  %s5 = inlined_call_operand.hbm [shape: f32[2,1,384], index: 5, kind: output, shape index: {}]
  %s6 = sld [smem:[#allocation0]]
  $region61: #{tpu_custom_call.1} parent=0
    _
  %s8 = ssub.s32 1, %s6
  %s9 = scalar_select 0, %s8, %s6
  %10 = sst [smem:[#allocation2]] %s4
  $region1: #{tpu_custom_call.1} parent=0
    #allocation3 [shape = 'u8[16384]{0}', space=vmem, size = 0x4000, scoped, tag = 'input window, operand 0']
    #allocation4 [shape = 's32[2]{0}', space=sflag, size = 0x8, scoped, tag = 'scoped memory for tpu_custom_call.1']
    #allocation5 [shape = 's32[2]{0}', space=sflag, size = 0x8, scoped, tag = 'scoped memory for tpu_custom_call.1']
    #allocation6 [shape = 's32[2]{0}', space=sflag, size = 0x8, scoped, tag = 'scoped memory for tpu_custom_call.1']
    #allocation7 [shape = 'u8[512]{0}', space=smem, size = 0x200, scoped, tag = 'input window, operand 3, single buffered']
    #allocation8 [shape = 'u8[3072]{0}', space=vmem, size = 0xc00, scoped, tag = 'output window, operand 0']
    %11 = vsyncpa [#allocation4], 0
    %s12 = scalar_lea.sflag [#allocation4], 1
    %13 = vsyncpa %s12, 0
    %14 = vsyncpa [#allocation6], 0
    %15 = vsyncpa [#allocation5], 0
    %s16 = scalar_lea.sflag [#allocation5], 1
    %17 = vsyncpa %s16, 0
    loop: start=0, step=1, limit=4
    $region2: #{tpu_custom_call.1} parent=1 // loop_pre_header
      _
    $region3: #{tpu_custom_call.1} parent=1 // loop_header
      %s19 = sphi 0, %s23
      %p20 = scmp.ge.s32.totalorder %s19, 4
      %s29 = sphi 0, %s31
      %s32 = sphi 0, %s29
      %s33 = sphi 0, %s32
      %s49 = sphi 0, %s33
      %s53 = sphi 0, %s53
      %s55 = sphi 0, %s53
      %s56 = sphi 0, %s55
      %s70 = sphi 0, %s56
      %s74 = sphi 0, %s74
      %s76 = sphi 0, %s74
      %s77 = sphi 0, %s76
      %s91 = sphi 0, %s77
      %s95 = sphi 0, %s95
      %s97 = sphi 0, %s95
      %s98 = sphi 0, %s97
      %s112 = sphi 0, %s98
      %s116 = sphi 0, %s116
      %s118 = sphi 0, %s116
      %s119 = sphi 0, %s118
      %s133 = sphi 0, %s119
      %s139 = sphi 0, %s141
      %s142 = sphi 0, %s139
      %s143 = sphi 0, %s142
      %s159 = sphi 0, %s143
    $region4: #{tpu_custom_call.1} parent=1 // loop_header_branch
      %22 = sbr.rel (%p20) target = $region8
    $region5: #{tpu_custom_call.1} parent=1 // loop_body
      %s24 = ssub.s32 %s19, 1
      %s25 = ssub.s32 %s19, 2
      %s26 = sadd.s32 %s19, 1
      %s27 = ssub.s32 %s19, %s26
      %p28 = scmp.eq.s32.totalorder %s27, 0
      %s30 = sadd.s32 %s29, 1
      %s31 = scalar_select %p28, %s29, %s30
      %p34 = pneg %p28
      %p35 = scmp.eq.s32.totalorder %s19, 1
      %p36 = por %p34, %p35
      %p37 = scmp.ne.s32.totalorder %s29, %s32
      %p38 = scmp.eq.s32.totalorder %s19, 0
      %p39 = por %p37, %p38
      %p40 = scmp.ne.s32.totalorder %s29, %s32
      %p41 = scmp.eq.s32.totalorder %s24, 1
      %p42 = por %p40, %p41
      %p43 = scmp.ne.s32.totalorder %s32, %s33
      %p44 = scmp.eq.s32.totalorder %s24, 0
      %p45 = por %p43, %p44
      %p46 = scmp.ne.s32.totalorder %s32, %s33
      %p47 = scmp.eq.s32.totalorder %s25, 1
      %p48 = por %p46, %p47
      %p50 = scmp.ne.s32.totalorder %s33, %s49
      %p51 = scmp.eq.s32.totalorder %s25, 0
      %p52 = por %p50, %p51
      %s54 = sadd.s32 %s53, 1
      %p57 = scmp.eq.s32.totalorder %s19, 1
      %p58 = scmp.ne.s32.totalorder %s53, %s55
      %p59 = scmp.eq.s32.totalorder %s19, 0
      %p60 = por %p58, %p59
      %p61 = scmp.ne.s32.totalorder %s53, %s55
      %p62 = scmp.eq.s32.totalorder %s24, 1
      %p63 = por %p61, %p62
      %p64 = scmp.ne.s32.totalorder %s55, %s56
      %p65 = scmp.eq.s32.totalorder %s24, 0
      %p66 = por %p64, %p65
      %p67 = scmp.ne.s32.totalorder %s55, %s56
      %p68 = scmp.eq.s32.totalorder %s25, 1
      %p69 = por %p67, %p68
      %p71 = scmp.ne.s32.totalorder %s56, %s70
      %p72 = scmp.eq.s32.totalorder %s25, 0
      %p73 = por %p71, %p72
      %s75 = sadd.s32 %s74, 1
      %p78 = scmp.eq.s32.totalorder %s19, 1
      %p79 = scmp.ne.s32.totalorder %s74, %s76
      %p80 = scmp.eq.s32.totalorder %s19, 0
      %p81 = por %p79, %p80
      %p82 = scmp.ne.s32.totalorder %s74, %s76
      %p83 = scmp.eq.s32.totalorder %s24, 1
      %p84 = por %p82, %p83
      %p85 = scmp.ne.s32.totalorder %s76, %s77
      %p86 = scmp.eq.s32.totalorder %s24, 0
      %p87 = por %p85, %p86
      %p88 = scmp.ne.s32.totalorder %s76, %s77
      %p89 = scmp.eq.s32.totalorder %s25, 1
      %p90 = por %p88, %p89
      %p92 = scmp.ne.s32.totalorder %s77, %s91
      %p93 = scmp.eq.s32.totalorder %s25, 0
      %p94 = por %p92, %p93
      %s96 = sadd.s32 %s95, 1
      %p99 = scmp.eq.s32.totalorder %s19, 1
      %p100 = scmp.ne.s32.totalorder %s95, %s97
      %p101 = scmp.eq.s32.totalorder %s19, 0
      %p102 = por %p100, %p101
      %p103 = scmp.ne.s32.totalorder %s95, %s97
      %p104 = scmp.eq.s32.totalorder %s24, 1
      %p105 = por %p103, %p104
      %p106 = scmp.ne.s32.totalorder %s97, %s98
      %p107 = scmp.eq.s32.totalorder %s24, 0
      %p108 = por %p106, %p107
      %p109 = scmp.ne.s32.totalorder %s97, %s98
      %p110 = scmp.eq.s32.totalorder %s25, 1
      %p111 = por %p109, %p110
      %p113 = scmp.ne.s32.totalorder %s98, %s112
      %p114 = scmp.eq.s32.totalorder %s25, 0
      %p115 = por %p113, %p114
      %s117 = sadd.s32 %s116, 1
      %p120 = scmp.eq.s32.totalorder %s19, 1
      %p121 = scmp.ne.s32.totalorder %s116, %s118
      %p122 = scmp.eq.s32.totalorder %s19, 0
      %p123 = por %p121, %p122
      %p124 = scmp.ne.s32.totalorder %s116, %s118
      %p125 = scmp.eq.s32.totalorder %s24, 1
      %p126 = por %p124, %p125
      %p127 = scmp.ne.s32.totalorder %s118, %s119
      %p128 = scmp.eq.s32.totalorder %s24, 0
      %p129 = por %p127, %p128
      %p130 = scmp.ne.s32.totalorder %s118, %s119
      %p131 = scmp.eq.s32.totalorder %s25, 1
      %p132 = por %p130, %p131
      %p134 = scmp.ne.s32.totalorder %s119, %s133
      %p135 = scmp.eq.s32.totalorder %s25, 0
      %p136 = por %p134, %p135
      %s137 = ssub.s32 %s19, %s26
      %p138 = scmp.eq.s32.totalorder %s137, 0
      %s140 = sadd.s32 %s139, 1
      %s141 = scalar_select %p138, %s139, %s140
      %p144 = pneg %p138
      %p145 = scmp.eq.s32.totalorder %s19, 1
      %p146 = por %p144, %p145
      %p147 = scmp.ne.s32.totalorder %s139, %s142
      %p148 = scmp.eq.s32.totalorder %s19, 0
      %p149 = por %p147, %p148
      %p150 = scmp.ne.s32.totalorder %s139, %s142
      %p151 = scmp.eq.s32.totalorder %s24, 1
      %p152 = por %p150, %p151
      %p153 = scmp.ne.s32.totalorder %s142, %s143
      %p154 = scmp.eq.s32.totalorder %s24, 0
      %p155 = por %p153, %p154
      %p156 = scmp.ne.s32.totalorder %s142, %s143
      %p157 = scmp.eq.s32.totalorder %s25, 1
      %p158 = por %p156, %p157
      %p160 = scmp.ne.s32.totalorder %s143, %s159
      %p161 = scmp.eq.s32.totalorder %s25, 0
      %p162 = por %p160, %p161
      %p163 = scmp.le.s32.totalorder 1, %s19
      %p164 = scmp.lt.s32.totalorder %s19, 3
      %p165 = pnand %p163, %p164
      %p166 = pneg %p165
      // Predicated region
      $region9: #{tpu_custom_call.1} parent=5 // pred_check
        _
      $region10: #{tpu_custom_call.1} parent=5 // pred_check_branch
        %168 = sbr.rel (%p165) target = $region12
      $region11: #{tpu_custom_call.1} parent=5 // pred_region
        %s169 = ssub.s32 %s19, 1
        // Predicated region
        $region13: #{tpu_custom_call.1} parent=11 // pred_check
          %p170 = pneg %p66
        $region14: #{tpu_custom_call.1} parent=11 // pred_check_branch
          %172 = sbr.rel (%p170) target = $region16
        $region15: #{tpu_custom_call.1} parent=11 // pred_region
          _
        $region16: #{tpu_custom_call.1} parent=11 // pred_fallthru
          _
        // Predicated region
        $region17: #{tpu_custom_call.1} parent=11 // pred_check
          %p173 = pneg %p87
        $region18: #{tpu_custom_call.1} parent=11 // pred_check_branch
          %175 = sbr.rel (%p173) target = $region20
        $region19: #{tpu_custom_call.1} parent=11 // pred_region
          _
        $region20: #{tpu_custom_call.1} parent=11 // pred_fallthru
          _
        // Predicated region
        $region21: #{tpu_custom_call.1} parent=11 // pred_check
          %p176 = pneg %p108
        $region22: #{tpu_custom_call.1} parent=11 // pred_check_branch
          %178 = sbr.rel (%p176) target = $region24
        $region23: #{tpu_custom_call.1} parent=11 // pred_region
          %180 = vsyncadd [#allocation6], 0
          %s182 = sshll.u32 %s3, 4
          %s183 = int_to_ptr.vmem [resolvable:$true] %s182
          %185 = dma.vmem_to_smem %s183, 16, [#allocation7], [#allocation6]
        $region24: #{tpu_custom_call.1} parent=11 // pred_fallthru
          _
        // Predicated region
        $region25: #{tpu_custom_call.1} parent=11 // pred_check
          %p186 = pneg %p129
        $region26: #{tpu_custom_call.1} parent=11 // pred_check_branch
          %188 = sbr.rel (%p186) target = $region28
        $region27: #{tpu_custom_call.1} parent=11 // pred_region
          _
        $region28: #{tpu_custom_call.1} parent=11 // pred_fallthru
          _
      $region12: #{tpu_custom_call.1} parent=5 // pred_fallthru
        _
      %p189 = scmp.lt.s32.totalorder %s19, 2
      // Predicated region
      $region29: #{tpu_custom_call.1} parent=5 // pred_check
        %p190 = pneg %p189
      $region30: #{tpu_custom_call.1} parent=5 // pred_check_branch
        %192 = sbr.rel (%p190) target = $region32
      $region31: #{tpu_custom_call.1} parent=5 // pred_region
        // Predicated region
        $region33: #{tpu_custom_call.1} parent=31 // pred_check
          %p193 = pneg %p39
        $region34: #{tpu_custom_call.1} parent=31 // pred_check_branch
          %195 = sbr.rel (%p193) target = $region36
        $region35: #{tpu_custom_call.1} parent=31 // pred_region
          %s196 = sand.u32 %s29, 1
          %s197 = scalar_lea.sflag [#allocation4], %s196
          %s198 = sand.u32 %s29, 1
          %s199 = smul.addr %s198, 16
          %s200 = scalar_lea.vmem [#allocation3], %s199
          %202 = vsyncadd %s197, 0
          %s203 = smul.addr %s19, 4
          %s204 = smul.addr %s203, 4
          %s205 = scalar_lea.hbm %s0, %s204
          %s207 = sshll.u32 %s205, 4
          %s208 = int_to_ptr.hbm [resolvable:$true] %s207
          %s209 = sshll.u32 %s200, 4
          %s210 = int_to_ptr.vmem [resolvable:$true] %s209
          %212 = dma.hbm_to_vmem [thread:$0]  %s208, 256, %s210, %s197
        $region36: #{tpu_custom_call.1} parent=31 // pred_fallthru
          _
      $region32: #{tpu_custom_call.1} parent=5 // pred_fallthru
        _
      %p213 = scmp.le.s32.totalorder 1, %s19
      %p214 = scmp.lt.s32.totalorder %s19, 3
      %p215 = pnand %p213, %p214
      %p216 = pneg %p215
      // Predicated region
      $region37: #{tpu_custom_call.1} parent=5 // pred_check
        _
      $region38: #{tpu_custom_call.1} parent=5 // pred_check_branch
        %218 = sbr.rel (%p215) target = $region40
      $region39: #{tpu_custom_call.1} parent=5 // pred_region
        %s219 = ssub.s32 %s19, 1
        %s220 = sand.u32 %s32, 1
        %s221 = scalar_lea.sflag [#allocation4], %s220
        %s222 = sand.u32 %s32, 1
        %s223 = smul.addr %s222, 16
        %s224 = scalar_lea.vmem [#allocation3], %s223
        // Predicated region
        $region41: #{tpu_custom_call.1} parent=39 // pred_check
          %p225 = pneg %p45
        $region42: #{tpu_custom_call.1} parent=39 // pred_check_branch
          %227 = sbr.rel (%p225) target = $region44
        $region43: #{tpu_custom_call.1} parent=39 // pred_region
          %229 = dma.done %s221, 256
        $region44: #{tpu_custom_call.1} parent=39 // pred_fallthru
          _
        // Predicated region
        $region45: #{tpu_custom_call.1} parent=39 // pred_check
          %p230 = pneg %p108
        $region46: #{tpu_custom_call.1} parent=39 // pred_check_branch
          %232 = sbr.rel (%p230) target = $region48
        $region47: #{tpu_custom_call.1} parent=39 // pred_region
          %234 = dma.done [#allocation6], 16
        $region48: #{tpu_custom_call.1} parent=39 // pred_fallthru
          _
        %235 = sfence
        %s236 = sand.u32 %s32, 1
        %s237 = scalar_lea.sflag [#allocation4], %s236
        %s238 = sand.u32 %s32, 1
        %s239 = smul.addr %s238, 16
        %s240 = scalar_lea.vmem [#allocation3], %s239
        %p241 = pneg %p45
        %p242 = pneg %p42
        %p243 = pneg %p66
        %p244 = pneg %p63
        %p245 = pneg %p87
        %p246 = pneg %p84
        %p247 = pneg %p108
        %p248 = pneg %p105
        %p249 = pneg %p129
        %p250 = pneg %p126
        %p251 = pneg %p155
        %p252 = pneg %p152
        %s253 = sand.u32 %s142, 1
        %s254 = scalar_lea.sflag [#allocation5], %s253
        %s255 = sand.u32 %s142, 1
        %s256 = smul.addr %s255, 3
        %s257 = scalar_lea.vmem [#allocation8], %s256
        %v259 = vld [vmem:[%s224] sm:$0xff]
        %v260 = vld [vmem:[%s224 + $0x8] sm:$0xff]
        %v263 = vunpack.c.l.b16 %v259
        %v264 = vunpack.c.h.b16 %v259
        %v265 = vunpack.c.l.b16 %v260
        %v266 = vpack.c.b16 %v263, %v263
        %v267 = vpack.c.b16 %v264, %v264
        %v268 = vpack.c.b16 %v265, %v265
        %v269 = vunpack.c.h.b16 %v260
        %v270 = vpack.c.b16 %v269, %v269
        %271 = vrot.lane.b32.xlu0 %v266, 127
        %v272 = vpop.permute.xlu0 %271
        %273 = vrot.lane.b32.xlu0 %v267, 127
        %v274 = vpop.permute.xlu0 %273
        %275 = vrot.lane.b32.xlu0 %v268, 127
        %v276 = vpop.permute.xlu0 %275
        %277 = vrot.lane.b32.xlu0 %v270, 127
        %v278 = vpop.permute.xlu0 %277
        %vm279 = vcmask 1039360
        %v280 = vsel %vm279, %v272, %v274
        %v281 = vsel %vm279, %v274, %v276
        %v282 = vsel %vm279, %v276, %v278
        %283 = vrot.lane.b32.xlu0 %v266, 126
        %v284 = vpop.permute.xlu0 %283
        %285 = vrot.lane.b32.xlu0 %v267, 126
        %v286 = vpop.permute.xlu0 %285
        %287 = vrot.lane.b32.xlu0 %v268, 126
        %v288 = vpop.permute.xlu0 %287
        %289 = vrot.lane.b32.xlu0 %v270, 126
        %v290 = vpop.permute.xlu0 %289
        %vm291 = vcmask 1031168
        %v292 = vsel %vm291, %v284, %v286
        %v293 = vsel %vm291, %v286, %v288
        %v294 = vsel %vm291, %v288, %v290
        %295 = vrot.lane.b32.xlu0 %v266, 110
        %v296 = vpop.permute.xlu0 %295
        %297 = vrot.lane.b32.xlu0 %v267, 110
        %v298 = vpop.permute.xlu0 %297
        %299 = vrot.lane.b32.xlu0 %v268, 110
        %v300 = vpop.permute.xlu0 %299
        %301 = vrot.lane.b32.xlu0 %v270, 110
        %v302 = vpop.permute.xlu0 %301
        %vm303 = vcmask 900096
        %v304 = vsel %vm303, %v296, %v298
        %v305 = vsel %vm303, %v298, %v300
        %v306 = vsel %vm303, %v300, %v302
        %307 = vrot.lane.b32.xlu0 %v266, 109
        %v308 = vpop.permute.xlu0 %307
        %309 = vrot.lane.b32.xlu0 %v267, 109
        %v310 = vpop.permute.xlu0 %309
        %311 = vrot.lane.b32.xlu0 %v268, 109
        %v312 = vpop.permute.xlu0 %311
        %313 = vrot.lane.b32.xlu0 %v270, 109
        %v314 = vpop.permute.xlu0 %313
        %vm315 = vcmask 891904
        %v316 = vsel %vm315, %v308, %v310
        %v317 = vsel %vm315, %v310, %v312
        %v318 = vsel %vm315, %v312, %v314
        %319 = vrot.lane.b32.xlu0 %v266, 108
        %v320 = vpop.permute.xlu0 %319
        %321 = vrot.lane.b32.xlu0 %v267, 108
        %v322 = vpop.permute.xlu0 %321
        %323 = vrot.lane.b32.xlu0 %v268, 108
        %v324 = vpop.permute.xlu0 %323
        %325 = vrot.lane.b32.xlu0 %v270, 108
        %v326 = vpop.permute.xlu0 %325
        %vm327 = vcmask 883712
        %v328 = vsel %vm327, %v320, %v322
        %v329 = vsel %vm327, %v322, %v324
        %v330 = vsel %vm327, %v324, %v326
        %331 = vrot.lane.b32.xlu0 %v266, 92
        %v332 = vpop.permute.xlu0 %331
        %333 = vrot.lane.b32.xlu0 %v267, 92
        %v334 = vpop.permute.xlu0 %333
        %335 = vrot.lane.b32.xlu0 %v268, 92
        %v336 = vpop.permute.xlu0 %335
        %337 = vrot.lane.b32.xlu0 %v270, 92
        %v338 = vpop.permute.xlu0 %337
        %vm339 = vcmask 752640
        %v340 = vsel %vm339, %v332, %v334
        %v341 = vsel %vm339, %v334, %v336
        %v342 = vsel %vm339, %v336, %v338
        %343 = vrot.lane.b32.xlu0 %v266, 91
        %v344 = vpop.permute.xlu0 %343
        %345 = vrot.lane.b32.xlu0 %v267, 91
        %v346 = vpop.permute.xlu0 %345
        %347 = vrot.lane.b32.xlu0 %v268, 91
        %v348 = vpop.permute.xlu0 %347
        %349 = vrot.lane.b32.xlu0 %v270, 91
        %v350 = vpop.permute.xlu0 %349
        %vm351 = vcmask 744448
        %v352 = vsel %vm351, %v344, %v346
        %v353 = vsel %vm351, %v346, %v348
        %v354 = vsel %vm351, %v348, %v350
        %355 = vrot.lane.b32.xlu0 %v266, 90
        %v356 = vpop.permute.xlu0 %355
        %357 = vrot.lane.b32.xlu0 %v267, 90
        %v358 = vpop.permute.xlu0 %357
        %359 = vrot.lane.b32.xlu0 %v268, 90
        %v360 = vpop.permute.xlu0 %359
        %361 = vrot.lane.b32.xlu0 %v270, 90
        %v362 = vpop.permute.xlu0 %361
        %vm363 = vcmask 736256
        %v364 = vsel %vm363, %v356, %v358
        %v365 = vsel %vm363, %v358, %v360
        %v366 = vsel %vm363, %v360, %v362
        %vm367 = vcmask 1043456
        %v370 = vsel %vm367, %v266, %v280
        %v374 = vsel %vm367, %v267, %v281
        %v378 = vsel %vm367, %v268, %v282
        %v382 = vsel %vm367, %v292, %v304
        %v386 = vsel %vm367, %v293, %v305
        %v390 = vsel %vm367, %v294, %v306
        %v394 = vsel %vm367, %v316, %v328
        %v398 = vsel %vm367, %v317, %v329
        %v402 = vsel %vm367, %v318, %v330
        %v406 = vsel %vm367, %v340, %v352
        %v410 = vsel %vm367, %v341, %v353
        %v414 = vsel %vm367, %v342, %v354
        %v416 = vld [vmem:[%s1] sm:$0x1]
        %v417 = vld [vmem:[%s2] sm:$0x3]
        %419 = vset.pattern.permute.xlu0 0
        %420 = vperm.xlu0 %419, %v417
        %v421 = vpop.permute.xlu0 %420
        %vm423 = vcmask 588800
        %v425 = vsel %vm423, %v416, 0
        %v428 = vsel %vm367, %v364, 0
        %v431 = vsel %vm367, %v365, 0
        %v434 = vsel %vm367, %v366, 0
        %436 = vmatpush.bf16.msra.mxu0 0
        %437 = vmatpush.bf16.msra.mxu0 0
        %438 = vmatpush.bf16.msra.mxu0 0
        %439 = vmatpush.bf16.msra.mxu0 %v428
        %440 = vmatpush.bf16.msra.mxu0 %v406
        %441 = vmatpush.bf16.msra.mxu0 %v394
        %442 = vmatpush.bf16.msra.mxu0 %v382
        %443 = vmatpush.bf16.msra.mxu0 %v370
        %444 = vmatmul.bf16.gmra.mxu0 %v425
        %v445 = vpop.f32.mrf.mxu0
        %v446 = vadd.f32 %v421, %v445
        %v447 = vpop.f32.mrf.mxu0
        %448 = vdwg.mxu0
        %449 = vmatpush.bf16.msra.mxu0 0
        %450 = vmatpush.bf16.msra.mxu0 0
        %451 = vmatpush.bf16.msra.mxu0 0
        %452 = vmatpush.bf16.msra.mxu0 %v431
        %453 = vmatpush.bf16.msra.mxu0 %v410
        %454 = vmatpush.bf16.msra.mxu0 %v398
        %455 = vmatpush.bf16.msra.mxu0 %v386
        %456 = vmatpush.bf16.msra.mxu0 %v374
        %457 = vmatmul.bf16.gmra.mxu0 %v425
        %v458 = vpop.f32.mrf.mxu0
        %v459 = vadd.f32 %v421, %v458
        %v460 = vpop.f32.mrf.mxu0
        %461 = vdwg.mxu0
        %462 = vmatpush.bf16.msra.mxu0 0
        %463 = vmatpush.bf16.msra.mxu0 0
        %464 = vmatpush.bf16.msra.mxu0 0
        %465 = vmatpush.bf16.msra.mxu0 %v434
        %466 = vmatpush.bf16.msra.mxu0 %v414
        %467 = vmatpush.bf16.msra.mxu0 %v402
        %468 = vmatpush.bf16.msra.mxu0 %v390
        %469 = vmatpush.bf16.msra.mxu0 %v378
        %470 = vmatmul.bf16.gmra.mxu0 %v425
        %v471 = vpop.f32.mrf.mxu0
        %v472 = vadd.f32 %v421, %v471
        %v473 = vpop.f32.mrf.mxu0
        %474 = vdwg.mxu0
        %v475 = vmax.f32 %v446, 0.0
        %v476 = vmax.f32 %v459, 0.0
        %v477 = vmax.f32 %v472, 0.0
        %s478 = sld [smem:[#allocation7]]
        %v479 = vstv %s478
        %v480 = vmul.f32 %v475, %v479
        %v481 = vmul.f32 %v476, %v479
        %v482 = vmul.f32 %v477, %v479
        %s483 = sld [smem:[#allocation7 + $0x1]]
        %v484 = vstv %s483
        %v485 = vmul.f32 %v475, %v484
        %v486 = vmul.f32 %v476, %v484
        %v487 = vmul.f32 %v477, %v484
        %v491 = vrot.slane %v485, 1
        %v492 = vrot.slane %v486, 1
        %v493 = vrot.slane %v487, 1
        %v497 = vadd.f32 %v480, %v491
        %v498 = vadd.f32 %v481, %v492
        %v499 = vadd.f32 %v482, %v493
        %s500 = sld [smem:[#allocation2]]
        %v501 = vstv %s500
        %v502 = vadd.f32 %v497, %v501
        %v503 = vadd.f32 %v498, %v501
        %v504 = vadd.f32 %v499, %v501
        %v508 = vrot.slane %v503, 7
        %v509 = vrot.slane %v504, 6
        %vm510 = vcmask 1040384
        %v511 = vsel %vm510, %v502, %v508
        %vm512 = vcmask 1041408
        %v513 = vsel %vm512, %v511, %v509
        %v515 = vlaneseq
        %vm516 = vcmp.ge.s32.totalorder %v515, 0
        %vm517 = vcmp.lt.s32.totalorder %v515, 384
        %vm518 = vmand %vm516, %vm517
        %519 = vst.msk [vmem:[%s257] sm:$0x7] %vm518, %v513
        %s520 = sand.u32 %s142, 1
        %s521 = scalar_lea.sflag [#allocation5], %s520
        %s522 = sand.u32 %s142, 1
        %s523 = smul.addr %s522, 3
        %s524 = scalar_lea.vmem [#allocation8], %s523
        // Predicated region
        $region49: #{tpu_custom_call.1} parent=39 // pred_check
          %p525 = pneg %p152
        $region50: #{tpu_custom_call.1} parent=39 // pred_check_branch
          %527 = sbr.rel (%p525) target = $region52
        $region51: #{tpu_custom_call.1} parent=39 // pred_region
          %529 = vsyncadd %s521, 0
          %s530 = smul.addr %s24, 3
          %s531 = scalar_lea.hbm %s5, %s530
          %s533 = sshll.u32 %s524, 4
          %s534 = int_to_ptr.vmem [resolvable:$true] %s533
          %s535 = sshll.u32 %s531, 4
          %s536 = int_to_ptr.hbm [resolvable:$true] %s535
          %538 = dma.vmem_to_hbm [thread:$0]  %s534, 48, %s536, %s521
        $region52: #{tpu_custom_call.1} parent=39 // pred_fallthru
          _
      $region40: #{tpu_custom_call.1} parent=5 // pred_fallthru
        _
      %p539 = scmp.le.s32.totalorder 2, %s19
      // Predicated region
      $region53: #{tpu_custom_call.1} parent=5 // pred_check
        %p540 = pneg %p539
      $region54: #{tpu_custom_call.1} parent=5 // pred_check_branch
        %542 = sbr.rel (%p540) target = $region56
      $region55: #{tpu_custom_call.1} parent=5 // pred_region
        %s543 = ssub.s32 %s19, 2
        // Predicated region
        $region57: #{tpu_custom_call.1} parent=55 // pred_check
          %p544 = pneg %p158
        $region58: #{tpu_custom_call.1} parent=55 // pred_check_branch
          %546 = sbr.rel (%p544) target = $region60
        $region59: #{tpu_custom_call.1} parent=55 // pred_region
          %s547 = sand.u32 %s143, 1
          %s548 = scalar_lea.sflag [#allocation5], %s547
          %s549 = sand.u32 %s143, 1
          %s550 = smul.addr %s549, 3
          %s551 = scalar_lea.vmem [#allocation8], %s550
          %553 = dma.done %s548, 48
        $region60: #{tpu_custom_call.1} parent=55 // pred_fallthru
          _
      $region56: #{tpu_custom_call.1} parent=5 // pred_fallthru
        _
    $region6: #{tpu_custom_call.1} parent=1 // loop_footer
      %s23 = sadd.s32 1, %s19
    $region7: #{tpu_custom_call.1} parent=1 // loop_footer_branch
      %18 = sbr.rel target = $region3
    $region8: #{tpu_custom_call.1} parent=1 // loop_exit
      _
    %554 = vsyncpa [#allocation4], 1
    %s555 = scalar_lea.sflag [#allocation4], 1
    %556 = vsyncpa %s555, 1
    %557 = vsyncpa [#allocation5], 1
    %s558 = scalar_lea.sflag [#allocation5], 1
    %559 = vsyncpa %s558, 1
    %560 = vsyncpa [#allocation6], 1
    %s561 = scalar_lea.sflag [#allocation6], 1
    %562 = vsyncpa %s561, 1

</llo_original>
